<compile_context>
chip_gen: v7x
topology: tpu7x:2x2x1
jax: 0.10.0
libtpu: 0.0.40
codegen_flags: <defaults>
</compile_context>

<pallas_src>
import math

import jax
import jax.numpy as jnp
from jax.experimental import pallas as pl
from jax.experimental.pallas import tpu as pltpu


# ----------------------------------------------------------------------------
# Helpers
# ----------------------------------------------------------------------------
def _round_up(x: int, m: int) -> int:
    return (x + m - 1) // m * m


def _elu(x):
    # ELU(alpha=1): x if x > 0 else exp(x) - 1.  Clamp the exp argument so the
    # unconditionally-evaluated false branch cannot overflow.
    return jnp.where(x > 0.0, x, jnp.exp(jnp.minimum(x, 0.0)) - 1.0)


def _pick_batch_tile(B: int, batch_tile: int) -> int:
    """Lane-dim tile over the batch.

    Must be a multiple of 128 unless it equals B (full extent).  Once B > 256
    we force >= 2 grid steps so v7x's two TensorCores both get work; for very
    large B the tile caps at `batch_tile` (default 1024) which amortizes the
    ~0.35 us/step pipeline overhead on v5e/v6e.
    """
    if B <= 256:
        return B                                   # one full-extent block
    half = _round_up((B + 1) // 2, 128)            # >= 2 grid steps
    tb = min(_round_up(batch_tile, 128), half)
    tb = max(tb, 128)
    return tb if tb < B else B


# ----------------------------------------------------------------------------
# Kernel
# ----------------------------------------------------------------------------
def _make_actor_kernel(num_hidden: int, action_dim: int,
                       log_std_min: float, log_std_max: float,
                       compute_dtype):
    """Feature-major MLP kernel.

    refs layout:
        [0]                 obs^T tile          (obs_dim, TB)   compute_dtype
        [1 .. 2*num_hidden] (W^T_i, b_i) pairs  W^T:(out,in) cd, b:(out,1) f32
        [.. +2]             W^T_head, b_head    fused [mean|log_std|pad] rows
        [-1]                out tile            (out_rows, TB)  f32
    """

    def kernel(*refs):
        x_ref = refs[0]
        out_ref = refs[-1]

        x = x_ref[...]                                  # (obs_dim, TB)

        idx = 1
        for _ in range(num_hidden):
            w = refs[idx][...]                          # (out, in)
            b = refs[idx + 1][...]                      # (out, 1) f32
            idx += 2
            # MXU feed in compute_dtype, f32 accumulate; bias + ELU in f32.
            h = jnp.dot(w, x, preferred_element_type=jnp.float32) + b
            h = _elu(h)
            x = h.astype(compute_dtype)                 # re-pack for next dot

        w_head = refs[idx][...]                         # (out_rows, hid)
        b_head = refs[idx + 1][...]                     # (out_rows, 1) f32

        # Fused head: rows [0:A) = mean, [A:2A) = log_std, [2A:out_rows) = 0.
        y = jnp.dot(w_head, x, preferred_element_type=jnp.float32) + b_head

        # Clamp only the log_std rows.  Padding rows are exactly zero (zero
        # weights + zero bias) so including them in the clamp is harmless.
        row = jax.lax.broadcasted_iota(jnp.int32, y.shape, 0)
        y = jnp.where(row >= action_dim,
                      jnp.clip(y, log_std_min, log_std_max), y)

        out_ref[...] = y.astype(out_ref.dtype)

    return kernel


# ----------------------------------------------------------------------------
# One-time parameter preparation (do this at init time, NOT per forward call)
# ----------------------------------------------------------------------------
def prepare_actor_params(raw_params, *, compute_dtype=jnp.bfloat16):
    """Transpose to (out, in), fuse mean/log_std into one padded head, cast.

    `raw_params` layout (mirrors the nn.Module):
        'hidden': list of (W, b) with W:(in, out), b:(1, out)
        'mean'  : (W, b)  W:(hid, A), b:(1, A)
        'log_std': (W, b) W:(hid, A), b:(1, A)
    """
    hidden = []
    for (w, b) in raw_params["hidden"]:
        hidden.append((jnp.asarray(w.T, compute_dtype),
                       jnp.asarray(b.reshape(-1, 1), jnp.float32)))

    w_m, b_m = raw_params["mean"]
    w_s, b_s = raw_params["log_std"]
    hid_last, action_dim = w_m.shape
    out_rows = _round_up(2 * action_dim, 8)

    w_head = jnp.zeros((out_rows, hid_last), jnp.float32)
    w_head = w_head.at[:action_dim].set(w_m.T)
    w_head = w_head.at[action_dim:2 * action_dim].set(w_s.T)
    b_head = jnp.zeros((out_rows, 1), jnp.float32)
    b_head = b_head.at[:action_dim, 0].set(b_m.reshape(-1))
    b_head = b_head.at[action_dim:2 * action_dim, 0].set(b_s.reshape(-1))

    return {
        "hidden": hidden,
        "head": (jnp.asarray(w_head, compute_dtype), b_head),
        "action_dim": int(action_dim),
        "compute_dtype": compute_dtype,
    }


# ----------------------------------------------------------------------------
# Forward wrapper
# ----------------------------------------------------------------------------
def actor_forward(obs, prepared, *, log_std_bounds=(-20.0, 2.0),
                  batch_tile: int = 1024):
    """Actor forward pass as a single Pallas kernel.

    Args:
        obs: (B, obs_dim) float array.
        prepared: output of `prepare_actor_params` (cached across calls).
    Returns:
        (mean, log_std): each (B, action_dim) float32.
    """
    hidden = prepared["hidden"]
    w_head, b_head = prepared["head"]
    action_dim = prepared["action_dim"]
    cdt = prepared["compute_dtype"]
    out_rows = w_head.shape[0]

    B, obs_dim = obs.shape

    # Feature-major input: one small transpose+cast per call (obs is tiny
    # relative to the output-traffic / MXU-fill savings it buys).
    obs_t = jnp.asarray(obs.T, cdt)                     # (obs_dim, B)

    tb = _pick_batch_tile(B, batch_tile)
    grid = (pl.cdiv(B, tb),)

    flat_inputs = [obs_t]
    in_specs = [pl.BlockSpec((obs_dim, tb), lambda i: (0, i))]
    for (w, b) in hidden:
        flat_inputs += [w, b]
        # Constant index_map -> VMEM-resident, never re-DMA'd across the grid.
        in_specs += [pl.BlockSpec(w.shape, lambda i: (0, 0)),
                     pl.BlockSpec(b.shape, lambda i: (0, 0))]
    flat_inputs += [w_head, b_head]
    in_specs += [pl.BlockSpec(w_head.shape, lambda i: (0, 0)),
                 pl.BlockSpec(b_head.shape, lambda i: (0, 0))]

    out_specs = pl.BlockSpec((out_rows, tb), lambda i: (0, i))

    kernel = _make_actor_kernel(len(hidden), action_dim,
                                float(log_std_bounds[0]),
                                float(log_std_bounds[1]),
                                cdt)

    out = pl.pallas_call(
        kernel,
        out_shape=jax.ShapeDtypeStruct((out_rows, B), jnp.float32),
        grid=grid,
        in_specs=in_specs,
        out_specs=out_specs,
        compiler_params=pltpu.CompilerParams(
            dimension_semantics=("parallel",),
        ),
    )(*flat_inputs)

    mean = out[:action_dim].T                           # (B, A) — tiny copies
    log_std = out[action_dim:2 * action_dim].T
    return mean, log_std


# ----------------------------------------------------------------------------
# Deterministic parameter initialization (mirrors the nn.Module __init__)
# ----------------------------------------------------------------------------
def init_actor_params(key, obs_dim, action_dim, hidden_dims,
                      init_log_std=0.0):
    params = {"hidden": []}
    prev_dim = obs_dim

    def linear_default(k, fan_in, fan_out):
        # PyTorch nn.Linear default: U(-1/sqrt(fan_in), 1/sqrt(fan_in))
        bound = 1.0 / math.sqrt(fan_in)
        k1, k2 = jax.random.split(k)
        w = jax.random.uniform(k1, (fan_in, fan_out), jnp.float32,
                               minval=-bound, maxval=bound)
        b = jax.random.uniform(k2, (1, fan_out), jnp.float32,
                               minval=-bound, maxval=bound)
        return w, b

    def xavier_head(k, fan_in, fan_out, gain, bias_val):
        bound = gain * math.sqrt(6.0 / (fan_in + fan_out))
        w = jax.random.uniform(k, (fan_in, fan_out), jnp.float32,
                               minval=-bound, maxval=bound)
        b = jnp.full((1, fan_out), bias_val, dtype=jnp.float32)
        return w, b

    for dim in hidden_dims:
        key, sub = jax.random.split(key)
        params["hidden"].append(linear_default(sub, prev_dim, dim))
        prev_dim = dim

    key, k_mean, k_std = jax.random.split(key, 3)
    params["mean"] = xavier_head(k_mean, prev_dim, action_dim, 0.01, 0.0)
    params["log_std"] = xavier_head(k_std, prev_dim, action_dim, 0.01,
                                    init_log_std)
    return params


# Pure-JAX reference (f32 math on the prepared/quantized params) for checking.
def _reference_forward(obs, prepared, log_std_bounds=(-20.0, 2.0)):
    x = obs.astype(jnp.float32)
    for (w_t, b) in prepared["hidden"]:
        x = x @ w_t.astype(jnp.float32).T + b.reshape(1, -1)
        x = jnp.where(x > 0.0, x, jnp.exp(jnp.minimum(x, 0.0)) - 1.0)
    w_head, b_head = prepared["head"]
    y = x @ w_head.astype(jnp.float32).T + b_head.reshape(1, -1)
    a = prepared["action_dim"]
    mean = y[:, :a]
    log_std = jnp.clip(y[:, a:2 * a], log_std_bounds[0], log_std_bounds[1])
    return mean, log_std


# TODO(synk): `sample_actions` requires Normal.rsample (host-side RNG key
# plumbing + tanh-squash log-prob); only the deterministic `forward`
# (mean, log_std) is implemented in the kernel.

if __name__ == "__main__":
    key = jax.random.PRNGKey(0)

    batch = 8
    obs_dim = 32
    action_dim = 8
    hidden_dims = [64, 64]

    key, k_obs, k_params = jax.random.split(key, 3)
    obs = jax.random.normal(k_obs, (batch, obs_dim), dtype=jnp.float32)
    raw_params = init_actor_params(k_params, obs_dim, action_dim, hidden_dims)

    # One-time prep (fuse / pad / transpose / cast) — cached across calls.
    prepared = prepare_actor_params(raw_params, compute_dtype=jnp.bfloat16)

    mean, log_std = actor_forward(obs, prepared)
    jax.block_until_ready((mean, log_std))

    ref_mean, ref_log_std = _reference_forward(obs, prepared)
    assert mean.shape == (batch, action_dim)
    assert log_std.shape == (batch, action_dim)
    # bf16 MXU feeds -> loose-but-safe tolerance vs the f32 reference.
    assert jnp.allclose(mean, ref_mean, atol=2e-2, rtol=2e-2)
    assert jnp.allclose(log_std, ref_log_std, atol=2e-2, rtol=2e-2)

    print("KERNEL_OK")
</pallas_src>

<mosaic_0001>
module attributes {stable_mosaic.version = 11 : i64} {
  func.func @kernel(%arg0: i32, %arg1: memref<32x8xbf16, #tpu.memory_space<vmem>>, %arg2: memref<64x32xbf16, #tpu.memory_space<vmem>>, %arg3: memref<64x1xf32, #tpu.memory_space<vmem>>, %arg4: memref<64x64xbf16, #tpu.memory_space<vmem>>, %arg5: memref<64x1xf32, #tpu.memory_space<vmem>>, %arg6: memref<16x64xbf16, #tpu.memory_space<vmem>>, %arg7: memref<16x1xf32, #tpu.memory_space<vmem>>, %arg8: memref<16x8xf32, #tpu.memory_space<vmem>>) attributes {dimension_semantics = [#tpu.dimension_semantics<parallel>], iteration_bounds = array<i64: 1>, scalar_prefetch = 0 : i64, scratch_operands = 0 : i64, tpu.core_type = #tpu.core_type<tc>, window_params = [{transform_indices = @transform_0, window_bounds = array<i64: 32, 8>}, {pipeline_mode = #tpu.pipeline_mode<synchronous>, transform_indices = @transform_1, window_bounds = array<i64: 64, 32>}, {pipeline_mode = #tpu.pipeline_mode<synchronous>, transform_indices = @transform_2, window_bounds = array<i64: 64, 1>}, {pipeline_mode = #tpu.pipeline_mode<synchronous>, transform_indices = @transform_3, window_bounds = array<i64: 64, 64>}, {pipeline_mode = #tpu.pipeline_mode<synchronous>, transform_indices = @transform_4, window_bounds = array<i64: 64, 1>}, {pipeline_mode = #tpu.pipeline_mode<synchronous>, transform_indices = @transform_5, window_bounds = array<i64: 16, 64>}, {pipeline_mode = #tpu.pipeline_mode<synchronous>, transform_indices = @transform_6, window_bounds = array<i64: 16, 1>}, {transform_indices = @transform_7, window_bounds = array<i64: 16, 8>}]} {
    %c0 = arith.constant 0 : index
    %c0_0 = arith.constant 0 : index
    %0 = vector.load %arg1[%c0, %c0_0] : memref<32x8xbf16, #tpu.memory_space<vmem>>, vector<32x8xbf16>
    %c0_1 = arith.constant 0 : index
    %c0_2 = arith.constant 0 : index
    %1 = vector.load %arg2[%c0_1, %c0_2] : memref<64x32xbf16, #tpu.memory_space<vmem>>, vector<64x32xbf16>
    %c0_3 = arith.constant 0 : index
    %c0_4 = arith.constant 0 : index
    %2 = vector.load %arg3[%c0_3, %c0_4] : memref<64x1xf32, #tpu.memory_space<vmem>>, vector<64x1xf32>
    %cst = arith.constant dense<0.000000e+00> : vector<64x8xf32>
    %3 = tpu.matmul %1, %0, %cst {dimension_numbers = #tpu.dot_dimension_numbers<[1], [0], [0], [1], [0, 0, 1, 1], [], []>} : vector<64x32xbf16>, vector<32x8xbf16>, vector<64x8xf32> -> vector<64x8xf32>
    %4 = vector.broadcast %2 : vector<64x1xf32> to vector<64x8xf32>
    %5 = arith.addf %3, %4 : vector<64x8xf32>
    %cst_5 = arith.constant 0.000000e+00 : f32
    %6 = vector.broadcast %cst_5 : f32 to vector<64x8xf32>
    %7 = arith.cmpf ogt, %5, %6 : vector<64x8xf32>
    %cst_6 = arith.constant 0.000000e+00 : f32
    %8 = vector.broadcast %cst_6 : f32 to vector<64x8xf32>
    %9 = arith.minimumf %5, %8 : vector<64x8xf32>
    %10 = math.exp %9 : vector<64x8xf32>
    %cst_7 = arith.constant 1.000000e+00 : f32
    %11 = vector.broadcast %cst_7 : f32 to vector<64x8xf32>
    %12 = arith.subf %10, %11 : vector<64x8xf32>
    %13 = arith.select %7, %5, %12 : vector<64x8xi1>, vector<64x8xf32>
    %14 = arith.truncf %13 : vector<64x8xf32> to vector<64x8xbf16>
    %c0_8 = arith.constant 0 : index
    %c0_9 = arith.constant 0 : index
    %15 = vector.load %arg4[%c0_8, %c0_9] : memref<64x64xbf16, #tpu.memory_space<vmem>>, vector<64x64xbf16>
    %c0_10 = arith.constant 0 : index
    %c0_11 = arith.constant 0 : index
    %16 = vector.load %arg5[%c0_10, %c0_11] : memref<64x1xf32, #tpu.memory_space<vmem>>, vector<64x1xf32>
    %cst_12 = arith.constant dense<0.000000e+00> : vector<64x8xf32>
    %17 = tpu.matmul %15, %14, %cst_12 {dimension_numbers = #tpu.dot_dimension_numbers<[1], [0], [0], [1], [0, 0, 1, 1], [], []>} : vector<64x64xbf16>, vector<64x8xbf16>, vector<64x8xf32> -> vector<64x8xf32>
    %18 = vector.broadcast %16 : vector<64x1xf32> to vector<64x8xf32>
    %19 = arith.addf %17, %18 : vector<64x8xf32>
    %cst_13 = arith.constant 0.000000e+00 : f32
    %20 = vector.broadcast %cst_13 : f32 to vector<64x8xf32>
    %21 = arith.cmpf ogt, %19, %20 : vector<64x8xf32>
    %cst_14 = arith.constant 0.000000e+00 : f32
    %22 = vector.broadcast %cst_14 : f32 to vector<64x8xf32>
    %23 = arith.minimumf %19, %22 : vector<64x8xf32>
    %24 = math.exp %23 : vector<64x8xf32>
    %cst_15 = arith.constant 1.000000e+00 : f32
    %25 = vector.broadcast %cst_15 : f32 to vector<64x8xf32>
    %26 = arith.subf %24, %25 : vector<64x8xf32>
    %27 = arith.select %21, %19, %26 : vector<64x8xi1>, vector<64x8xf32>
    %28 = arith.truncf %27 : vector<64x8xf32> to vector<64x8xbf16>
    %c0_16 = arith.constant 0 : index
    %c0_17 = arith.constant 0 : index
    %29 = vector.load %arg6[%c0_16, %c0_17] : memref<16x64xbf16, #tpu.memory_space<vmem>>, vector<16x64xbf16>
    %c0_18 = arith.constant 0 : index
    %c0_19 = arith.constant 0 : index
    %30 = vector.load %arg7[%c0_18, %c0_19] : memref<16x1xf32, #tpu.memory_space<vmem>>, vector<16x1xf32>
    %cst_20 = arith.constant dense<0.000000e+00> : vector<16x8xf32>
    %31 = tpu.matmul %29, %28, %cst_20 {dimension_numbers = #tpu.dot_dimension_numbers<[1], [0], [0], [1], [0, 0, 1, 1], [], []>} : vector<16x64xbf16>, vector<64x8xbf16>, vector<16x8xf32> -> vector<16x8xf32>
    %32 = vector.broadcast %30 : vector<16x1xf32> to vector<16x8xf32>
    %33 = arith.addf %31, %32 : vector<16x8xf32>
    %34 = tpu.iota {dimensions = array<i32: 0>} : vector<16x8xi32>
    %c8_i32 = arith.constant 8 : i32
    %35 = vector.broadcast %c8_i32 : i32 to vector<16x8xi32>
    %36 = arith.cmpi sge, %34, %35 : vector<16x8xi32>
    %cst_21 = arith.constant -2.000000e+01 : f32
    %cst_22 = arith.constant 2.000000e+00 : f32
    %37 = vector.broadcast %cst_21 : f32 to vector<16x8xf32>
    %38 = arith.maximumf %37, %33 : vector<16x8xf32>
    %39 = vector.broadcast %cst_22 : f32 to vector<16x8xf32>
    %40 = arith.minimumf %39, %38 : vector<16x8xf32>
    %41 = arith.select %36, %40, %33 : vector<16x8xi1>, vector<16x8xf32>
    %c0_23 = arith.constant 0 : index
    %c0_24 = arith.constant 0 : index
    %42 = vector.load %arg8[%c0_23, %c0_24] : memref<16x8xf32, #tpu.memory_space<vmem>>, vector<16x8xf32>
    tpu.vector_store %arg8[%c0_23, %c0_24], %41 {strides = array<i32>} : memref<16x8xf32, #tpu.memory_space<vmem>>, vector<16x8xf32>,
    return
  }
  func.func @transform_0(%arg0: i32) -> (i32, i32) {
    %c0_i32 = arith.constant 0 : i32
    %c0_i32_0 = arith.constant 0 : i32
    return %c0_i32, %arg0 : i32, i32
  }
  func.func @transform_1(%arg0: i32) -> (i32, i32) {
    %c0_i32 = arith.constant 0 : i32
    %c0_i32_0 = arith.constant 0 : i32
    %c0_i32_1 = arith.constant 0 : i32
    return %c0_i32, %c0_i32_0 : i32, i32
  }
  func.func @transform_2(%arg0: i32) -> (i32, i32) {
    %c0_i32 = arith.constant 0 : i32
    %c0_i32_0 = arith.constant 0 : i32
    %c0_i32_1 = arith.constant 0 : i32
    return %c0_i32, %c0_i32_0 : i32, i32
  }
  func.func @transform_3(%arg0: i32) -> (i32, i32) {
    %c0_i32 = arith.constant 0 : i32
    %c0_i32_0 = arith.constant 0 : i32
    %c0_i32_1 = arith.constant 0 : i32
    return %c0_i32, %c0_i32_0 : i32, i32
  }
  func.func @transform_4(%arg0: i32) -> (i32, i32) {
    %c0_i32 = arith.constant 0 : i32
    %c0_i32_0 = arith.constant 0 : i32
    %c0_i32_1 = arith.constant 0 : i32
    return %c0_i32, %c0_i32_0 : i32, i32
  }
  func.func @transform_5(%arg0: i32) -> (i32, i32) {
    %c0_i32 = arith.constant 0 : i32
    %c0_i32_0 = arith.constant 0 : i32
    %c0_i32_1 = arith.constant 0 : i32
    return %c0_i32, %c0_i32_0 : i32, i32
  }
  func.func @transform_6(%arg0: i32) -> (i32, i32) {
    %c0_i32 = arith.constant 0 : i32
    %c0_i32_0 = arith.constant 0 : i32
    %c0_i32_1 = arith.constant 0 : i32
    return %c0_i32, %c0_i32_0 : i32, i32
  }
  func.func @transform_7(%arg0: i32) -> (i32, i32) {
    %c0_i32 = arith.constant 0 : i32
    %c0_i32_0 = arith.constant 0 : i32
    return %c0_i32, %arg0 : i32, i32
  }
}

</mosaic_0001>

<llo_original>
// kernel: tpu_custom_call.1
$region0: #{tpu_custom_call.1}
  #allocation0 [shape = 'u32[]', space=smem, size = 0x4, offset = 0x4, fixed_abs, tag = 'smem constant byte address 0x4 - core index']
  #allocation1 [shape = 'u32[144,128]{1,0:T(1,128)}', space=vmem, size = 0x12000, scoped, tag = 'internal scratch']
  %s0 = inlined_call_operand.vmem [shape: bf16[32,8], index: 0, kind: input, shape index: {}]
  %s1 = inlined_call_operand.vmem [shape: bf16[64,32], index: 1, kind: input, shape index: {}]
  %s2 = inlined_call_operand.vmem [shape: f32[64,1], index: 2, kind: input, shape index: {}]
  %s3 = inlined_call_operand.vmem [shape: bf16[64,64], index: 3, kind: input, shape index: {}]
  %s4 = inlined_call_operand.vmem [shape: f32[64,1], index: 4, kind: input, shape index: {}]
  %s5 = inlined_call_operand.vmem [shape: bf16[16,64], index: 5, kind: input, shape index: {}]
  %s6 = inlined_call_operand.vmem [shape: f32[16,1], index: 6, kind: input, shape index: {}]
  %s7 = inlined_call_operand.vmem [shape: f32[16,8], index: 7, kind: output, shape index: {}]
  %s8 = sld [smem:[#allocation0]]
  $region38: #{tpu_custom_call.1} parent=0
    _
  %s10 = ssub.s32 1, %s8
  %s11 = scalar_select 0, %s10, %s8
  // Predicated region
  $region2: #{tpu_custom_call.1} parent=0 // pred_check
    _
  $region3: #{tpu_custom_call.1} parent=0 // pred_check_branch
    %13 = sbr.rel (0) target = $region5
  $region4: #{tpu_custom_call.1} parent=0 // pred_region
    _
  $region5: #{tpu_custom_call.1} parent=0 // pred_fallthru
    _
  // Predicated region
  $region6: #{tpu_custom_call.1} parent=0 // pred_check
    _
  $region7: #{tpu_custom_call.1} parent=0 // pred_check_branch
    %15 = sbr.rel (0) target = $region9
  $region8: #{tpu_custom_call.1} parent=0 // pred_region
    _
  $region9: #{tpu_custom_call.1} parent=0 // pred_fallthru
    _
  // Predicated region
  $region10: #{tpu_custom_call.1} parent=0 // pred_check
    _
  $region11: #{tpu_custom_call.1} parent=0 // pred_check_branch
    %17 = sbr.rel (0) target = $region13
  $region12: #{tpu_custom_call.1} parent=0 // pred_region
    _
  $region13: #{tpu_custom_call.1} parent=0 // pred_fallthru
    _
  // Predicated region
  $region14: #{tpu_custom_call.1} parent=0 // pred_check
    _
  $region15: #{tpu_custom_call.1} parent=0 // pred_check_branch
    %19 = sbr.rel (0) target = $region17
  $region16: #{tpu_custom_call.1} parent=0 // pred_region
    _
  $region17: #{tpu_custom_call.1} parent=0 // pred_fallthru
    _
  // Predicated region
  $region18: #{tpu_custom_call.1} parent=0 // pred_check
    _
  $region19: #{tpu_custom_call.1} parent=0 // pred_check_branch
    %21 = sbr.rel (0) target = $region21
  $region20: #{tpu_custom_call.1} parent=0 // pred_region
    _
  $region21: #{tpu_custom_call.1} parent=0 // pred_fallthru
    _
  // Predicated region
  $region22: #{tpu_custom_call.1} parent=0 // pred_check
    _
  $region23: #{tpu_custom_call.1} parent=0 // pred_check_branch
    %23 = sbr.rel (0) target = $region25
  $region24: #{tpu_custom_call.1} parent=0 // pred_region
    _
  $region25: #{tpu_custom_call.1} parent=0 // pred_fallthru
    _
  // Predicated region
  $region26: #{tpu_custom_call.1} parent=0 // pred_check
    _
  $region27: #{tpu_custom_call.1} parent=0 // pred_check_branch
    %25 = sbr.rel (0) target = $region29
  $region28: #{tpu_custom_call.1} parent=0 // pred_region
    _
  $region29: #{tpu_custom_call.1} parent=0 // pred_fallthru
    _
  %v27 = vld [vmem:[%s0] sm:$0xf]
  %v28 = vld [vmem:[%s0 + $0x4] sm:$0xf]
  %v29 = vld [vmem:[%s0 + $0x8] sm:$0xf]
  %v30 = vld [vmem:[%s0 + $0xc] sm:$0xf]
  %v31 = vld [vmem:[%s1] sm:$0xf]
  %v32 = vld [vmem:[%s1 + $0x4] sm:$0xf]
  %v33 = vld [vmem:[%s1 + $0x8] sm:$0xf]
  %v34 = vld [vmem:[%s1 + $0xc] sm:$0xf]
  %v35 = vld [vmem:[%s1 + $0x10] sm:$0xf]
  %v36 = vld [vmem:[%s1 + $0x14] sm:$0xf]
  %v37 = vld [vmem:[%s1 + $0x18] sm:$0xf]
  %v38 = vld [vmem:[%s1 + $0x1c] sm:$0xf]
  %v39 = vld [vmem:[%s2] sm:$0xff]
  %v40 = vld [vmem:[%s2 + $0x8] sm:$0xff]
  %v41 = vld [vmem:[%s2 + $0x10] sm:$0xff]
  %v42 = vld [vmem:[%s2 + $0x18] sm:$0xff]
  %v43 = vld [vmem:[%s2 + $0x20] sm:$0xff]
  %v44 = vld [vmem:[%s2 + $0x28] sm:$0xff]
  %v45 = vld [vmem:[%s2 + $0x30] sm:$0xff]
  %v46 = vld [vmem:[%s2 + $0x38] sm:$0xff]
  %48 = vset.pattern.permute.xlu0 0
  %49 = vperm.xlu0 %48, %v39
  %v50 = vpop.permute.xlu0 %49
  %53 = vset.pattern.permute.xlu0 0
  %54 = vperm.xlu0 %53, %v40
  %v55 = vpop.permute.xlu0 %54
  %58 = vset.pattern.permute.xlu0 0
  %59 = vperm.xlu0 %58, %v41
  %v60 = vpop.permute.xlu0 %59
  %63 = vset.pattern.permute.xlu0 0
  %64 = vperm.xlu0 %63, %v42
  %v65 = vpop.permute.xlu0 %64
  %68 = vset.pattern.permute.xlu0 0
  %69 = vperm.xlu0 %68, %v43
  %v70 = vpop.permute.xlu0 %69
  %73 = vset.pattern.permute.xlu0 0
  %74 = vperm.xlu0 %73, %v44
  %v75 = vpop.permute.xlu0 %74
  %78 = vset.pattern.permute.xlu0 0
  %79 = vperm.xlu0 %78, %v45
  %v80 = vpop.permute.xlu0 %79
  %83 = vset.pattern.permute.xlu0 0
  %84 = vperm.xlu0 %83, %v46
  %v85 = vpop.permute.xlu0 %84
  %v95 = vunpack.c.l.b16 %v31
  %v96 = vunpack.c.l.b16 %v32
  %v97 = vunpack.c.l.b16 %v33
  %v98 = vunpack.c.l.b16 %v34
  %v99 = vunpack.c.l.b16 %v35
  %v100 = vunpack.c.l.b16 %v36
  %v101 = vunpack.c.l.b16 %v37
  %v102 = vunpack.c.l.b16 %v38
  %v103 = vpack.c.b16 %v96, %v95
  %v104 = vpack.c.b16 %v98, %v97
  %v105 = vpack.c.b16 %v100, %v99
  %v106 = vpack.c.b16 %v102, %v101
  %v111 = vunpack.c.l.b16 %v27
  %v112 = vunpack.c.l.b16 %v28
  %v113 = vunpack.c.l.b16 %v29
  %v114 = vunpack.c.l.b16 %v30
  %v115 = vpack.c.b16 %v112, %v111
  %v116 = vpack.c.b16 %v114, %v113
  %vm119 = vcmask 261120
  %v121 = vsel %vm119, %v103, 0
  %v124 = vsel %vm119, %v104, 0
  %v127 = vsel %vm119, %v105, 0
  %v130 = vsel %vm119, %v106, 0
  %132 = vmatprep.subr.bf16.mxu0 0
  %133 = vmatpush1.bf16.msra.mxu0 %v115
  %134 = vmatprep.subr.bf16.mxu0 0
  %135 = vmatpush1.bf16.msra.mxu0 %v116
  %136 = vmatprep.subr.bf16.mxu0 0
  %137 = vmatpush1.bf16.msra.mxu0 0
  %138 = vmatprep.subr.bf16.mxu0 0
  %139 = vmatpush1.bf16.msra.mxu0 0
  %140 = vmatprep.subr.bf16.mxu0 0
  %141 = vmatpush1.bf16.msra.mxu0 0
  %142 = vmatprep.subr.bf16.mxu0 0
  %143 = vmatpush1.bf16.msra.mxu0 0
  %144 = vmatprep.subr.bf16.mxu0 0
  %145 = vmatpush1.bf16.msra.mxu0 0
  %146 = vmatprep.subr.bf16.mxu0 0
  %147 = vmatpush1.bf16.msra.mxu0 0
  %148 = vmatprep.subr.bf16.mxu0 0
  %149 = vmatpush1.bf16.msra.mxu0 0
  %150 = vmatprep.subr.bf16.mxu0 0
  %151 = vmatpush1.bf16.msra.mxu0 0
  %152 = vmatprep.subr.bf16.mxu0 0
  %153 = vmatpush1.bf16.msra.mxu0 0
  %154 = vmatprep.subr.bf16.mxu0 0
  %155 = vmatpush1.bf16.msra.mxu0 0
  %156 = vmatprep.subr.bf16.mxu0 0
  %157 = vmatpush1.bf16.msra.mxu0 0
  %158 = vmatprep.subr.bf16.mxu0 0
  %159 = vmatpush1.bf16.msra.mxu0 0
  %160 = vmatprep.subr.bf16.mxu0 0
  %161 = vmatpush1.bf16.msra.mxu0 0
  %162 = vmatprep.subr.bf16.mxu0 0
  %163 = vmatpush1.bf16.msra.mxu0 0
  %164 = vmatprep.mubr.bf16.mxu0 0
  %165 = vmatmul.mubr.bf16.gmra.mrb[0].mxu0 %v121
  %v166 = vpop.f32.mrb[0].mxu0
  %v167 = vadd.f32 %v50, %v166
  %v168 = vpop.f32.mrb[0].mxu0
  %v169 = vpop.f32.mrb[0].mxu0
  %v170 = vadd.f32 %v55, %v169
  %v171 = vpop.f32.mrb[0].mxu0
  %172 = vmatprep.mubr.bf16.mxu0 0
  %173 = vmatmul.mubr.bf16.gmra.mrb[0].mxu0 %v124
  %v174 = vpop.f32.mrb[0].mxu0
  %v175 = vadd.f32 %v60, %v174
  %v176 = vpop.f32.mrb[0].mxu0
  %v177 = vpop.f32.mrb[0].mxu0
  %v178 = vadd.f32 %v65, %v177
  %v179 = vpop.f32.mrb[0].mxu0
  %180 = vmatprep.mubr.bf16.mxu0 0
  %181 = vmatmul.mubr.bf16.gmra.mrb[0].mxu0 %v127
  %v182 = vpop.f32.mrb[0].mxu0
  %v183 = vadd.f32 %v70, %v182
  %v184 = vpop.f32.mrb[0].mxu0
  %v185 = vpop.f32.mrb[0].mxu0
  %v186 = vadd.f32 %v75, %v185
  %v187 = vpop.f32.mrb[0].mxu0
  %188 = vmatprep.mubr.bf16.mxu0 0
  %189 = vmatmul.mubr.bf16.gmra.mrb[0].mxu0 %v130
  %v190 = vpop.f32.mrb[0].mxu0
  %v191 = vadd.f32 %v80, %v190
  %v192 = vpop.f32.mrb[0].mxu0
  %v193 = vpop.f32.mrb[0].mxu0
  %v194 = vadd.f32 %v85, %v193
  %v195 = vpop.f32.mrb[0].mxu0
  %196 = vdwg.mxu0
  %vm197 = vcmp.gt.f32.partialorder %v167, 0.0
  %vm198 = vcmp.gt.f32.partialorder %v170, 0.0
  %vm199 = vcmp.gt.f32.partialorder %v175, 0.0
  %vm200 = vcmp.gt.f32.partialorder %v178, 0.0
  %vm201 = vcmp.gt.f32.partialorder %v183, 0.0
  %vm202 = vcmp.gt.f32.partialorder %v186, 0.0
  %vm203 = vcmp.gt.f32.partialorder %v191, 0.0
  %vm204 = vcmp.gt.f32.partialorder %v194, 0.0
  %v205 = vmin.f32 %v167, 0.0
  %v206 = vmin.f32 %v170, 0.0
  %v207 = vmin.f32 %v175, 0.0
  %v208 = vmin.f32 %v178, 0.0
  %v209 = vmin.f32 %v183, 0.0
  %v210 = vmin.f32 %v186, 0.0
  %v211 = vmin.f32 %v191, 0.0
  %v212 = vmin.f32 %v194, 0.0
  %v213 = vmul.f32 %v205, 1.442695
  %v214 = vpow.pop %v213
  %v215 = vmul.f32 %v206, 1.442695
  %v216 = vpow.pop %v215
  %v217 = vmul.f32 %v207, 1.442695
  %v218 = vpow.pop %v217
  %v219 = vmul.f32 %v208, 1.442695
  %v220 = vpow.pop %v219
  %v221 = vmul.f32 %v209, 1.442695
  %v222 = vpow.pop %v221
  %v223 = vmul.f32 %v210, 1.442695
  %v224 = vpow.pop %v223
  %v225 = vmul.f32 %v211, 1.442695
  %v226 = vpow.pop %v225
  %v227 = vmul.f32 %v212, 1.442695
  %v228 = vpow.pop %v227
  %v229 = vsub.f32 %v214, 1.0
  %v230 = vsub.f32 %v216, 1.0
  %v231 = vsub.f32 %v218, 1.0
  %v232 = vsub.f32 %v220, 1.0
  %v233 = vsub.f32 %v222, 1.0
  %v234 = vsub.f32 %v224, 1.0
  %v235 = vsub.f32 %v226, 1.0
  %v236 = vsub.f32 %v228, 1.0
  %v237 = vsel %vm197, %v167, %v229
  %v238 = vsel %vm198, %v170, %v230
  %v239 = vsel %vm199, %v175, %v231
  %v240 = vsel %vm200, %v178, %v232
  %v241 = vsel %vm201, %v183, %v233
  %v242 = vsel %vm202, %v186, %v234
  %v243 = vsel %vm203, %v191, %v235
  %v244 = vsel %vm204, %v194, %v236
  %v245 = vpack.c.bf16 %v238, %v237
  %v246 = vpack.c.bf16 %v240, %v239
  %v247 = vpack.c.bf16 %v242, %v241
  %v248 = vpack.c.bf16 %v244, %v243
  %v249 = vld [vmem:[%s3] sm:$0xf]
  %v250 = vld [vmem:[%s3 + $0x4] sm:$0xf]
  %v251 = vld [vmem:[%s3 + $0x8] sm:$0xf]
  %v252 = vld [vmem:[%s3 + $0xc] sm:$0xf]
  %v253 = vld [vmem:[%s3 + $0x10] sm:$0xf]
  %v254 = vld [vmem:[%s3 + $0x14] sm:$0xf]
  %v255 = vld [vmem:[%s3 + $0x18] sm:$0xf]
  %v256 = vld [vmem:[%s3 + $0x1c] sm:$0xf]
  %v257 = vld [vmem:[%s4] sm:$0xff]
  %v258 = vld [vmem:[%s4 + $0x8] sm:$0xff]
  %v259 = vld [vmem:[%s4 + $0x10] sm:$0xff]
  %v260 = vld [vmem:[%s4 + $0x18] sm:$0xff]
  %v261 = vld [vmem:[%s4 + $0x20] sm:$0xff]
  %v262 = vld [vmem:[%s4 + $0x28] sm:$0xff]
  %v263 = vld [vmem:[%s4 + $0x30] sm:$0xff]
  %v264 = vld [vmem:[%s4 + $0x38] sm:$0xff]
  %266 = vset.pattern.permute.xlu0 0
  %267 = vperm.xlu0 %266, %v257
  %v268 = vpop.permute.xlu0 %267
  %271 = vset.pattern.permute.xlu0 0
  %272 = vperm.xlu0 %271, %v258
  %v273 = vpop.permute.xlu0 %272
  %276 = vset.pattern.permute.xlu0 0
  %277 = vperm.xlu0 %276, %v259
  %v278 = vpop.permute.xlu0 %277
  %281 = vset.pattern.permute.xlu0 0
  %282 = vperm.xlu0 %281, %v260
  %v283 = vpop.permute.xlu0 %282
  %286 = vset.pattern.permute.xlu0 0
  %287 = vperm.xlu0 %286, %v261
  %v288 = vpop.permute.xlu0 %287
  %291 = vset.pattern.permute.xlu0 0
  %292 = vperm.xlu0 %291, %v262
  %v293 = vpop.permute.xlu0 %292
  %296 = vset.pattern.permute.xlu0 0
  %297 = vperm.xlu0 %296, %v263
  %v298 = vpop.permute.xlu0 %297
  %301 = vset.pattern.permute.xlu0 0
  %302 = vperm.xlu0 %301, %v264
  %v303 = vpop.permute.xlu0 %302
  %v313 = vunpack.c.l.b16 %v249
  %v314 = vunpack.c.l.b16 %v250
  %v315 = vunpack.c.l.b16 %v251
  %v316 = vunpack.c.l.b16 %v252
  %v317 = vunpack.c.l.b16 %v253
  %v318 = vunpack.c.l.b16 %v254
  %v319 = vunpack.c.l.b16 %v255
  %v320 = vunpack.c.l.b16 %v256
  %v321 = vpack.c.b16 %v314, %v313
  %v322 = vpack.c.b16 %v316, %v315
  %v323 = vpack.c.b16 %v318, %v317
  %v324 = vpack.c.b16 %v320, %v319
  %vm325 = vcmask 523264
  %v327 = vsel %vm325, %v321, 0
  %v330 = vsel %vm325, %v322, 0
  %v333 = vsel %vm325, %v323, 0
  %v336 = vsel %vm325, %v324, 0
  %338 = vmatprep.subr.bf16.mxu0 0
  %339 = vmatpush1.bf16.msra.mxu0 %v245
  %340 = vmatprep.subr.bf16.mxu0 0
  %341 = vmatpush1.bf16.msra.mxu0 %v246
  %342 = vmatprep.subr.bf16.mxu0 0
  %343 = vmatpush1.bf16.msra.mxu0 %v247
  %344 = vmatprep.subr.bf16.mxu0 0
  %345 = vmatpush1.bf16.msra.mxu0 %v248
  %346 = vmatprep.subr.bf16.mxu0 0
  %347 = vmatpush1.bf16.msra.mxu0 0
  %348 = vmatprep.subr.bf16.mxu0 0
  %349 = vmatpush1.bf16.msra.mxu0 0
  %350 = vmatprep.subr.bf16.mxu0 0
  %351 = vmatpush1.bf16.msra.mxu0 0
  %352 = vmatprep.subr.bf16.mxu0 0
  %353 = vmatpush1.bf16.msra.mxu0 0
  %354 = vmatprep.subr.bf16.mxu0 0
  %355 = vmatpush1.bf16.msra.mxu0 0
  %356 = vmatprep.subr.bf16.mxu0 0
  %357 = vmatpush1.bf16.msra.mxu0 0
  %358 = vmatprep.subr.bf16.mxu0 0
  %359 = vmatpush1.bf16.msra.mxu0 0
  %360 = vmatprep.subr.bf16.mxu0 0
  %361 = vmatpush1.bf16.msra.mxu0 0
  %362 = vmatprep.subr.bf16.mxu0 0
  %363 = vmatpush1.bf16.msra.mxu0 0
  %364 = vmatprep.subr.bf16.mxu0 0
  %365 = vmatpush1.bf16.msra.mxu0 0
  %366 = vmatprep.subr.bf16.mxu0 0
  %367 = vmatpush1.bf16.msra.mxu0 0
  %368 = vmatprep.subr.bf16.mxu0 0
  %369 = vmatpush1.bf16.msra.mxu0 0
  %370 = vmatprep.mubr.bf16.mxu0 0
  %371 = vmatmul.mubr.bf16.gmra.mrb[0].mxu0 %v327
  %v372 = vpop.f32.mrb[0].mxu0
  %v373 = vadd.f32 %v268, %v372
  %v374 = vpop.f32.mrb[0].mxu0
  %v375 = vpop.f32.mrb[0].mxu0
  %v376 = vadd.f32 %v273, %v375
  %v377 = vpop.f32.mrb[0].mxu0
  %378 = vmatprep.mubr.bf16.mxu0 0
  %379 = vmatmul.mubr.bf16.gmra.mrb[0].mxu0 %v330
  %v380 = vpop.f32.mrb[0].mxu0
  %v381 = vadd.f32 %v278, %v380
  %v382 = vpop.f32.mrb[0].mxu0
  %v383 = vpop.f32.mrb[0].mxu0
  %v384 = vadd.f32 %v283, %v383
  %v385 = vpop.f32.mrb[0].mxu0
  %386 = vmatprep.mubr.bf16.mxu0 0
  %387 = vmatmul.mubr.bf16.gmra.mrb[0].mxu0 %v333
  %v388 = vpop.f32.mrb[0].mxu0
  %v389 = vadd.f32 %v288, %v388
  %v390 = vpop.f32.mrb[0].mxu0
  %v391 = vpop.f32.mrb[0].mxu0
  %v392 = vadd.f32 %v293, %v391
  %v393 = vpop.f32.mrb[0].mxu0
  %394 = vmatprep.mubr.bf16.mxu0 0
  %395 = vmatmul.mubr.bf16.gmra.mrb[0].mxu0 %v336
  %v396 = vpop.f32.mrb[0].mxu0
  %v397 = vadd.f32 %v298, %v396
  %v398 = vpop.f32.mrb[0].mxu0
  %v399 = vpop.f32.mrb[0].mxu0
  %v400 = vadd.f32 %v303, %v399
  %v401 = vpop.f32.mrb[0].mxu0
  %402 = vdwg.mxu0
  %vm403 = vcmp.gt.f32.partialorder %v373, 0.0
  %vm404 = vcmp.gt.f32.partialorder %v376, 0.0
  %vm405 = vcmp.gt.f32.partialorder %v381, 0.0
  %vm406 = vcmp.gt.f32.partialorder %v384, 0.0
  %vm407 = vcmp.gt.f32.partialorder %v389, 0.0
  %vm408 = vcmp.gt.f32.partialorder %v392, 0.0
  %vm409 = vcmp.gt.f32.partialorder %v397, 0.0
  %vm410 = vcmp.gt.f32.partialorder %v400, 0.0
  %v411 = vmin.f32 %v373, 0.0
  %v412 = vmin.f32 %v376, 0.0
  %v413 = vmin.f32 %v381, 0.0
  %v414 = vmin.f32 %v384, 0.0
  %v415 = vmin.f32 %v389, 0.0
  %v416 = vmin.f32 %v392, 0.0
  %v417 = vmin.f32 %v397, 0.0
  %v418 = vmin.f32 %v400, 0.0
  %v419 = vmul.f32 %v411, 1.442695
  %v420 = vpow.pop %v419
  %v421 = vmul.f32 %v412, 1.442695
  %v422 = vpow.pop %v421
  %v423 = vmul.f32 %v413, 1.442695
  %v424 = vpow.pop %v423
  %v425 = vmul.f32 %v414, 1.442695
  %v426 = vpow.pop %v425
  %v427 = vmul.f32 %v415, 1.442695
  %v428 = vpow.pop %v427
  %v429 = vmul.f32 %v416, 1.442695
  %v430 = vpow.pop %v429
  %v431 = vmul.f32 %v417, 1.442695
  %v432 = vpow.pop %v431
  %v433 = vmul.f32 %v418, 1.442695
  %v434 = vpow.pop %v433
  %v435 = vsub.f32 %v420, 1.0
  %v436 = vsub.f32 %v422, 1.0
  %v437 = vsub.f32 %v424, 1.0
  %v438 = vsub.f32 %v426, 1.0
  %v439 = vsub.f32 %v428, 1.0
  %v440 = vsub.f32 %v430, 1.0
  %v441 = vsub.f32 %v432, 1.0
  %v442 = vsub.f32 %v434, 1.0
  %v443 = vsel %vm403, %v373, %v435
  %v444 = vsel %vm404, %v376, %v436
  %v445 = vsel %vm405, %v381, %v437
  %v446 = vsel %vm406, %v384, %v438
  %v447 = vsel %vm407, %v389, %v439
  %v448 = vsel %vm408, %v392, %v440
  %v449 = vsel %vm409, %v397, %v441
  %v450 = vsel %vm410, %v400, %v442
  %v451 = vpack.c.bf16 %v444, %v443
  %v452 = vpack.c.bf16 %v446, %v445
  %v453 = vpack.c.bf16 %v448, %v447
  %v454 = vpack.c.bf16 %v450, %v449
  %v455 = vld [vmem:[%s5] sm:$0xf]
  %v456 = vld [vmem:[%s5 + $0x4] sm:$0xf]
  %v457 = vld [vmem:[%s6] sm:$0xff]
  %v458 = vld [vmem:[%s6 + $0x8] sm:$0xff]
  %460 = vset.pattern.permute.xlu0 0
  %461 = vperm.xlu0 %460, %v457
  %v462 = vpop.permute.xlu0 %461
  %465 = vset.pattern.permute.xlu0 0
  %466 = vperm.xlu0 %465, %v458
  %v467 = vpop.permute.xlu0 %466
  %v471 = vunpack.c.l.b16 %v455
  %v472 = vunpack.c.l.b16 %v456
  %v473 = vpack.c.b16 %v472, %v471
  %v475 = vsel %vm325, %v473, 0
  %477 = vmatprep.subr.bf16.mxu0 0
  %478 = vmatpush1.bf16.msra.mxu0 %v451
  %479 = vmatprep.subr.bf16.mxu0 0
  %480 = vmatpush1.bf16.msra.mxu0 %v452
  %481 = vmatprep.subr.bf16.mxu0 0
  %482 = vmatpush1.bf16.msra.mxu0 %v453
  %483 = vmatprep.subr.bf16.mxu0 0
  %484 = vmatpush1.bf16.msra.mxu0 %v454
  %485 = vmatprep.subr.bf16.mxu0 0
  %486 = vmatpush1.bf16.msra.mxu0 0
  %487 = vmatprep.subr.bf16.mxu0 0
  %488 = vmatpush1.bf16.msra.mxu0 0
  %489 = vmatprep.subr.bf16.mxu0 0
  %490 = vmatpush1.bf16.msra.mxu0 0
  %491 = vmatprep.subr.bf16.mxu0 0
  %492 = vmatpush1.bf16.msra.mxu0 0
  %493 = vmatprep.subr.bf16.mxu0 0
  %494 = vmatpush1.bf16.msra.mxu0 0
  %495 = vmatprep.subr.bf16.mxu0 0
  %496 = vmatpush1.bf16.msra.mxu0 0
  %497 = vmatprep.subr.bf16.mxu0 0
  %498 = vmatpush1.bf16.msra.mxu0 0
  %499 = vmatprep.subr.bf16.mxu0 0
  %500 = vmatpush1.bf16.msra.mxu0 0
  %501 = vmatprep.subr.bf16.mxu0 0
  %502 = vmatpush1.bf16.msra.mxu0 0
  %503 = vmatprep.subr.bf16.mxu0 0
  %504 = vmatpush1.bf16.msra.mxu0 0
  %505 = vmatprep.subr.bf16.mxu0 0
  %506 = vmatpush1.bf16.msra.mxu0 0
  %507 = vmatprep.subr.bf16.mxu0 0
  %508 = vmatpush1.bf16.msra.mxu0 0
  %509 = vmatprep.mubr.bf16.mxu0 0
  %510 = vmatmul.mubr.bf16.gmra.mrb[0].mxu0 %v475
  %v511 = vpop.f32.mrb[0].mxu0
  %v512 = vadd.f32 %v462, %v511
  %v513 = vpop.f32.mrb[0].mxu0
  %v514 = vpop.f32.mrb[0].mxu0
  %v515 = vadd.f32 %v467, %v514
  %v516 = vpop.f32.mrb[0].mxu0
  %517 = vdwg.mxu0
  %v518 = vlaneseq
  %v519 = vshrl.u32 %v518, 7
  %v520 = vadd.s32 %v519, 8
  %vm521 = vcmp.ge.s32.totalorder %v519, 8
  %vm522 = vcmp.ge.s32.totalorder %v520, 8
  %v523 = vmax.f32 %v512, -20.0
  %v524 = vmax.f32 %v515, -20.0
  %v525 = vmin.f32 %v523, 2.0
  %v526 = vmin.f32 %v524, 2.0
  %v527 = vsel %vm521, %v525, %v512
  %v528 = vsel %vm522, %v526, %v515
  %vm529 = vcmask 64512
  %530 = vst.msk [vmem:[%s7] sm:$0xff] %vm529, %v527
  %531 = vst.msk [vmem:[%s7 + $0x8] sm:$0xff] %vm529, %v528
  // Predicated region
  $region30: #{tpu_custom_call.1} parent=0 // pred_check
    _
  $region31: #{tpu_custom_call.1} parent=0 // pred_check_branch
    %533 = sbr.rel (0) target = $region33
  $region32: #{tpu_custom_call.1} parent=0 // pred_region
    _
  $region33: #{tpu_custom_call.1} parent=0 // pred_fallthru
    _
  // Predicated region
  $region34: #{tpu_custom_call.1} parent=0 // pred_check
    _
  $region35: #{tpu_custom_call.1} parent=0 // pred_check_branch
    %535 = sbr.rel (0) target = $region37
  $region36: #{tpu_custom_call.1} parent=0 // pred_region
    _
  $region37: #{tpu_custom_call.1} parent=0 // pred_fallthru
    _

</llo_original>
